<compile_context>
chip_gen: v5e
topology: v5e:2x2
jax: 0.10.0
libtpu: 0.0.40
codegen_flags: <defaults>
</compile_context>

<pallas_src>
import functools

import jax
import jax.numpy as jnp
from jax.experimental import pallas as pl
from jax.experimental.pallas import tpu as pltpu


ALPHA = 0.25
GAMMA = 2

# Exact reciprocal keeps the result bit-close to exp(-bce); flip to True to ride the
# EUP vrcp slot (~1e-4 relative error) if downstream numerics tolerate it.
_APPROX_RECIPROCAL = False

# Keep each (TILE_B, C) f32 block <= ~4 MiB so 3 arrays x 2 pipeline buffers stay well
# inside the smallest default scoped-VMEM budget (v5e: 16 MiB; v7x: 32 MiB of a 64 MiB part).
_TARGET_BLOCK_BYTES = 4 << 20
_MAX_TILE_B = 512


def _focal_loss_kernel(x_ref, t_ref, o_ref, *, alpha, gamma):
    # All math in f32, cast in-VMEM; inputs/targets may arrive in any float/int dtype.
    x = x_ref[...].astype(jnp.float32)
    t = t_ref[...].astype(jnp.float32)

    # Numerically stable binary_cross_entropy_with_logits (reduction='none'):
    #   bce = max(x, 0) - x*t + log1p(exp(-|x|))
    e = jnp.exp(-jnp.abs(x))                               # EUP exp (reused below)
    bce = jnp.maximum(x, 0.0) - x * t + jnp.log1p(e)       # EUP log1p

    # pt = exp(-bce). For binary {0,1} targets (which the module's alpha-gather assumes)
    # this is exactly sigmoid(x) for t==1 and 1-sigmoid(x) for t==0, so we reuse `e`
    # instead of spending a third EUP exp per element.
    inv = pl.reciprocal(1.0 + e, approx=_APPROX_RECIPROCAL)
    p = jnp.where(x >= 0.0, inv, e * inv)                  # p = sigmoid(x)
    pt = jnp.where(t == 0.0, 1.0 - p, p)

    # at = alpha.gather(0, (t != 0)) -> elementwise select against immediates (no SMEM table).
    at = jnp.where(t == 0.0, jnp.float32(alpha), jnp.float32(1.0 - alpha))

    # (1 - pt) ** gamma as plain VPU multiplies (gamma stays a Python int; no EUP pow).
    one_minus_pt = 1.0 - pt
    if gamma == 2:
        mod = one_minus_pt * one_minus_pt
    else:
        mod = one_minus_pt ** int(gamma)                   # lax.integer_pow -> VPU

    o_ref[...] = (at * mod * bce).astype(o_ref.dtype)


def _choose_tile_b(B, C, itemsize=4):
    rows = _TARGET_BLOCK_BYTES // max(1, C * itemsize)
    rows = max(8, min(_MAX_TILE_B, (rows // 8) * 8))
    return B if B <= rows else rows


def weighted_focal_loss(inputs, targets, alpha=ALPHA, gamma=GAMMA):
    """inputs: (B, num_classes) logits; targets: (B, num_classes) binary labels in any
    float/int dtype (cast happens in-VMEM, no wrapper copy). Returns the per-element
    focal loss, shape (B, num_classes) float32 (PyTorch module, reduction='none')."""
    assert inputs.shape == targets.shape and inputs.ndim == 2
    B, C = inputs.shape

    # Keep the output lane-dense: pad the class dim up to a multiple of 128 (no-op when it
    # already is) instead of tiling below a full vreg lane width.
    C_pad = -(-C // 128) * 128
    if C_pad != C:
        inputs = jnp.pad(inputs, ((0, 0), (0, C_pad - C)))
        targets = jnp.pad(targets, ((0, 0), (0, C_pad - C)))

    tile_b = _choose_tile_b(B, C_pad)
    grid = (pl.cdiv(B, tile_b),)

    kernel = functools.partial(_focal_loss_kernel, alpha=float(alpha), gamma=int(gamma))

    cost = pl.CostEstimate(
        flops=10 * B * C_pad,
        transcendentals=2 * B * C_pad,
        bytes_accessed=int(
            inputs.size * inputs.dtype.itemsize
            + targets.size * targets.dtype.itemsize
            + B * C_pad * 4
        ),
    )

    out = pl.pallas_call(
        kernel,
        out_shape=jax.ShapeDtypeStruct((B, C_pad), jnp.float32),
        grid=grid,
        in_specs=[
            pl.BlockSpec((tile_b, C_pad), lambda i: (i, 0)),   # logits
            pl.BlockSpec((tile_b, C_pad), lambda i: (i, 0)),   # targets (native dtype)
        ],
        out_specs=pl.BlockSpec((tile_b, C_pad), lambda i: (i, 0)),
        compiler_params=pltpu.CompilerParams(
            # Batch tiles are independent: shard across TensorCores (v7x megacore).
            dimension_semantics=("parallel",),
        ),
        cost_estimate=cost,
    )(inputs, targets)

    return out[:, :C] if C_pad != C else out


def _reference(inputs, targets, alpha=ALPHA, gamma=GAMMA):
    # Pure-JAX mirror of the PyTorch forward (pt = exp(-bce)).
    x = inputs.astype(jnp.float32)
    t = targets.astype(jnp.float32)
    bce = jnp.maximum(x, 0.0) - x * t + jnp.log1p(jnp.exp(-jnp.abs(x)))
    at = jnp.where(t == 0.0, alpha, 1.0 - alpha)
    pt = jnp.exp(-bce)
    return at * (1.0 - pt) ** gamma * bce


if __name__ == "__main__":
    key = jax.random.PRNGKey(0)
    k1, k2, k3, k4 = jax.random.split(key, 4)

    # Small shape consistent with the module: (batch=8, num_classes=128).
    B, NUM_CLASSES = 8, 128
    logits = jax.random.normal(k1, (B, NUM_CLASSES), dtype=jnp.float32)
    targets = jax.random.bernoulli(k2, p=0.3, shape=(B, NUM_CLASSES)).astype(jnp.float32)

    out = jax.block_until_ready(weighted_focal_loss(logits, targets))
    ref = _reference(logits, targets)
    assert out.shape == (B, NUM_CLASSES)
    assert jnp.allclose(out, ref, atol=1e-5, rtol=1e-5), "mismatch vs reference (small)"

    # Multi-tile path (ragged last batch block) to exercise the pipelined batch grid.
    B2 = 1040
    logits2 = jax.random.normal(k3, (B2, NUM_CLASSES), dtype=jnp.float32)
    targets2 = jax.random.bernoulli(k4, p=0.3, shape=(B2, NUM_CLASSES)).astype(jnp.float32)
    out2 = jax.block_until_ready(weighted_focal_loss(logits2, targets2))
    ref2 = _reference(logits2, targets2)
    assert out2.shape == (B2, NUM_CLASSES)
    assert jnp.allclose(out2, ref2, atol=1e-5, rtol=1e-5), "mismatch vs reference (tiled)"

    print("KERNEL_OK")
</pallas_src>

<mosaic_0001>
module attributes {stable_mosaic.version = 11 : i64} {
  func.func @_focal_loss_kernel(%arg0: i32, %arg1: memref<8x128xf32, #tpu.memory_space<vmem>>, %arg2: memref<8x128xf32, #tpu.memory_space<vmem>>, %arg3: memref<8x128xf32, #tpu.memory_space<vmem>>) attributes {dimension_semantics = [#tpu.dimension_semantics<parallel>], iteration_bounds = array<i64: 1>, scalar_prefetch = 0 : i64, scratch_operands = 0 : i64, tpu.core_type = #tpu.core_type<tc>, window_params = [{transform_indices = @transform_0, window_bounds = array<i64: 8, 128>}, {transform_indices = @transform_1, window_bounds = array<i64: 8, 128>}, {transform_indices = @transform_2, window_bounds = array<i64: 8, 128>}]} {
    %c0 = arith.constant 0 : index
    %c0_0 = arith.constant 0 : index
    %0 = vector.load %arg1[%c0, %c0_0] : memref<8x128xf32, #tpu.memory_space<vmem>>, vector<8x128xf32>
    %c0_1 = arith.constant 0 : index
    %c0_2 = arith.constant 0 : index
    %1 = vector.load %arg2[%c0_1, %c0_2] : memref<8x128xf32, #tpu.memory_space<vmem>>, vector<8x128xf32>
    %2 = math.absf %0 : vector<8x128xf32>
    %cst = arith.constant 0.000000e+00 : f32
    %3 = vector.broadcast %cst : f32 to vector<8x128xf32>
    %4 = arith.subf %3, %2 : vector<8x128xf32>
    %5 = math.exp %4 : vector<8x128xf32>
    %cst_3 = arith.constant 0.000000e+00 : f32
    %6 = vector.broadcast %cst_3 : f32 to vector<8x128xf32>
    %7 = arith.maximumf %0, %6 : vector<8x128xf32>
    %8 = arith.mulf %0, %1 : vector<8x128xf32>
    %9 = arith.subf %7, %8 : vector<8x128xf32>
    %10 = math.log1p %5 : vector<8x128xf32>
    %11 = arith.addf %9, %10 : vector<8x128xf32>
    %cst_4 = arith.constant 1.000000e+00 : f32
    %12 = vector.broadcast %cst_4 : f32 to vector<8x128xf32>
    %13 = arith.addf %12, %5 : vector<8x128xf32>
    %14 = tpu.reciprocal %13 : vector<8x128xf32> -> vector<8x128xf32>
    %cst_5 = arith.constant 0.000000e+00 : f32
    %15 = vector.broadcast %cst_5 : f32 to vector<8x128xf32>
    %16 = arith.cmpf oge, %0, %15 : vector<8x128xf32>
    %17 = arith.mulf %5, %14 : vector<8x128xf32>
    %18 = arith.select %16, %14, %17 : vector<8x128xi1>, vector<8x128xf32>
    %cst_6 = arith.constant 0.000000e+00 : f32
    %19 = vector.broadcast %cst_6 : f32 to vector<8x128xf32>
    %20 = arith.cmpf oeq, %1, %19 : vector<8x128xf32>
    %cst_7 = arith.constant 1.000000e+00 : f32
    %21 = vector.broadcast %cst_7 : f32 to vector<8x128xf32>
    %22 = arith.subf %21, %18 : vector<8x128xf32>
    %23 = arith.select %20, %22, %18 : vector<8x128xi1>, vector<8x128xf32>
    %cst_8 = arith.constant 0.000000e+00 : f32
    %24 = vector.broadcast %cst_8 : f32 to vector<8x128xf32>
    %25 = arith.cmpf oeq, %1, %24 : vector<8x128xf32>
    %cst_9 = arith.constant 2.500000e-01 : f32
    %cst_10 = arith.constant 7.500000e-01 : f32
    %26 = vector.broadcast %cst_9 : f32 to vector<8x128xf32>
    %27 = vector.broadcast %cst_10 : f32 to vector<8x128xf32>
    %28 = arith.select %25, %26, %27 : vector<8x128xi1>, vector<8x128xf32>
    %cst_11 = arith.constant 1.000000e+00 : f32
    %29 = vector.broadcast %cst_11 : f32 to vector<8x128xf32>
    %30 = arith.subf %29, %23 : vector<8x128xf32>
    %31 = arith.mulf %30, %30 : vector<8x128xf32>
    %32 = arith.mulf %28, %31 : vector<8x128xf32>
    %33 = arith.mulf %32, %11 : vector<8x128xf32>
    %c0_12 = arith.constant 0 : index
    %c0_13 = arith.constant 0 : index
    %34 = vector.load %arg3[%c0_12, %c0_13] : memref<8x128xf32, #tpu.memory_space<vmem>>, vector<8x128xf32>
    tpu.vector_store %arg3[%c0_12, %c0_13], %33 {strides = array<i32>} : memref<8x128xf32, #tpu.memory_space<vmem>>, vector<8x128xf32>,
    return
  }
  func.func @transform_0(%arg0: i32) -> (i32, i32) {
    %c0_i32 = arith.constant 0 : i32
    %c0_i32_0 = arith.constant 0 : i32
    return %arg0, %c0_i32 : i32, i32
  }
  func.func @transform_1(%arg0: i32) -> (i32, i32) {
    %c0_i32 = arith.constant 0 : i32
    %c0_i32_0 = arith.constant 0 : i32
    return %arg0, %c0_i32 : i32, i32
  }
  func.func @transform_2(%arg0: i32) -> (i32, i32) {
    %c0_i32 = arith.constant 0 : i32
    %c0_i32_0 = arith.constant 0 : i32
    return %arg0, %c0_i32 : i32, i32
  }
}

</mosaic_0001>

<llo_original>
// kernel: tpu_custom_call.1
$region0: #{tpu_custom_call.1}
  #allocation0 [shape = 'u32[]', space=smem, size = 0x4, offset = 0x4, fixed_abs, tag = 'smem constant byte address 0x4 - core index']
  #allocation1 [shape = 'u32[72,128]{1,0:T(1,128)}', space=vmem, size = 0x9000, scoped, tag = 'internal scratch']
  %s0 = inlined_call_operand.hbm [shape: f32[8,128], index: 0, kind: input, shape index: {}]
  %s1 = inlined_call_operand.hbm [shape: f32[8,128], index: 1, kind: input, shape index: {}]
  %s2 = inlined_call_operand.hbm [shape: f32[8,128], index: 2, kind: output, shape index: {}]
  %s3 = sld [smem:[#allocation0]]
  $region26: #{tpu_custom_call.1} parent=0
    _
  %s5 = ssub.s32 1, %s3
  %s6 = scalar_select 0, %s5, %s3
  $region1: #{tpu_custom_call.1} parent=0
    #allocation2 [shape = 'u8[4096]{0}', space=vmem, size = 0x1000, scoped, tag = 'input window, operand 0, single buffered']
    #allocation3 [shape = 's32[1]{0}', space=sflag, size = 0x4, scoped, tag = 'scoped memory for tpu_custom_call.1']
    #allocation4 [shape = 's32[1]{0}', space=sflag, size = 0x4, scoped, tag = 'scoped memory for tpu_custom_call.1']
    #allocation5 [shape = 'u8[4096]{0}', space=vmem, size = 0x1000, scoped, tag = 'input window, operand 1, single buffered']
    #allocation6 [shape = 's32[1]{0}', space=sflag, size = 0x4, scoped, tag = 'scoped memory for tpu_custom_call.1']
    #allocation7 [shape = 'u8[4096]{0}', space=vmem, size = 0x1000, scoped, tag = 'output window, operand 0, single buffered']
    %7 = vsyncpa [#allocation3], 0
    %8 = vsyncpa [#allocation6], 0
    %9 = vsyncpa [#allocation4], 0
    // Predicated region
    $region2: #{tpu_custom_call.1} parent=1 // pred_check
      _
    $region3: #{tpu_custom_call.1} parent=1 // pred_check_branch
      %11 = sbr.rel (0) target = $region5
    $region4: #{tpu_custom_call.1} parent=1 // pred_region
      %13 = vsyncadd [#allocation3], 0
      %s15 = sshll.u32 %s0, 4
      %s16 = int_to_ptr.hbm [resolvable:$true] %s15
      %s17 = sshll.u32 [#allocation2], 4
      %s18 = int_to_ptr.vmem [resolvable:$true] %s17
      %20 = dma.hbm_to_vmem [thread:$0]  %s16, 128, %s18, [#allocation3]
    $region5: #{tpu_custom_call.1} parent=1 // pred_fallthru
      _
    // Predicated region
    $region6: #{tpu_custom_call.1} parent=1 // pred_check
      _
    $region7: #{tpu_custom_call.1} parent=1 // pred_check_branch
      %22 = sbr.rel (0) target = $region9
    $region8: #{tpu_custom_call.1} parent=1 // pred_region
      %24 = vsyncadd [#allocation6], 0
      %s26 = sshll.u32 %s1, 4
      %s27 = int_to_ptr.hbm [resolvable:$true] %s26
      %s28 = sshll.u32 [#allocation5], 4
      %s29 = int_to_ptr.vmem [resolvable:$true] %s28
      %31 = dma.hbm_to_vmem [thread:$0]  %s27, 128, %s29, [#allocation6]
    $region9: #{tpu_custom_call.1} parent=1 // pred_fallthru
      _
    // Predicated region
    $region10: #{tpu_custom_call.1} parent=1 // pred_check
      _
    $region11: #{tpu_custom_call.1} parent=1 // pred_check_branch
      %33 = sbr.rel (0) target = $region13
    $region12: #{tpu_custom_call.1} parent=1 // pred_region
      %35 = dma.done [#allocation3], 128
    $region13: #{tpu_custom_call.1} parent=1 // pred_fallthru
      _
    // Predicated region
    $region14: #{tpu_custom_call.1} parent=1 // pred_check
      _
    $region15: #{tpu_custom_call.1} parent=1 // pred_check_branch
      %37 = sbr.rel (0) target = $region17
    $region16: #{tpu_custom_call.1} parent=1 // pred_region
      %39 = dma.done [#allocation6], 128
    $region17: #{tpu_custom_call.1} parent=1 // pred_fallthru
      _
    %v40 = vld [vmem:[#allocation2] sm:$0xff]
    %v41 = vld [vmem:[#allocation5] sm:$0xff]
    %v42 = vand.u32 2147483647, %v40
    %v43 = vsub.f32 0.0, %v42
    %v44 = vmul.f32 %v43, 1.442695
    %v45 = vpow.pop %v44
    %v46 = vmax.f32 %v40, 0.0
    %v47 = vmul.f32 %v40, %v41
    %v48 = vsub.f32 %v46, %v47
    %v49 = vadd.f32 %v45, 1.0
    %v50 = vlog2.pop %v49
    %v51 = vmul.f32 %v50, 0.6931472
    %v52 = vmul.f32 -0.5, %v45
    %v53 = vadd.f32 %v52, 1.0
    %v54 = vmul.f32 %v53, %v45
    %v55 = vand.u32 2147483647, %v45
    %vm56 = vcmp.lt.f32.partialorder %v55, 0.0004427343
    %v57 = vsel %vm56, %v54, %v51
    %v58 = vadd.f32 %v48, %v57
    %v59 = vadd.f32 %v45, 1.0
    %v60 = vrcp.pop %v59
    %v61 = vmul.f32 %v59, %v60
    %v62 = vsub.f32 1.0, %v61
    %v63 = vmul.f32 %v60, %v62
    %v64 = vadd.f32 %v60, %v63
    %vm65 = vweird.f32 %v59
    %vm66 = vweird.f32 %v60
    %vm67 = vmor %vm65, %vm66
    %v68 = vsel %vm67, %v60, %v64
    %v69 = vand.u32 2147483647, %v59
    %vm70 = vcmp.eq.f32.partialorder %v69, 8.507059e+37
    %v71 = vand.u32 %v59, 2147483648
    %v72 = vor.u32 1.1754944e-38, %v71
    %v73 = vsel %vm70, %v72, %v68
    %vm74 = vcmp.ge.f32.partialorder %v40, 0.0
    %v75 = vmul.f32 %v45, %v73
    %v76 = vsel %vm74, %v73, %v75
    %vm77 = vcmp.eq.f32.partialorder %v41, 0.0
    %v78 = vsub.f32 1.0, %v76
    %v79 = vsel %vm77, %v78, %v76
    %v80 = vsel %vm77, 0.25, 0.75
    %v81 = vsub.f32 1.0, %v79
    %v82 = vmul.f32 %v81, %v81
    %v83 = vmul.f32 %v80, %v82
    %v84 = vmul.f32 %v83, %v58
    %85 = vst [vmem:[#allocation7] sm:$0xff] %v84
    // Predicated region
    $region18: #{tpu_custom_call.1} parent=1 // pred_check
      _
    $region19: #{tpu_custom_call.1} parent=1 // pred_check_branch
      %87 = sbr.rel (0) target = $region21
    $region20: #{tpu_custom_call.1} parent=1 // pred_region
      %89 = vsyncadd [#allocation4], 0
      %s91 = sshll.u32 [#allocation7], 4
      %s92 = int_to_ptr.vmem [resolvable:$true] %s91
      %s93 = sshll.u32 %s2, 4
      %s94 = int_to_ptr.hbm [resolvable:$true] %s93
      %96 = dma.vmem_to_hbm [thread:$0]  %s92, 128, %s94, [#allocation4]
    $region21: #{tpu_custom_call.1} parent=1 // pred_fallthru
      _
    // Predicated region
    $region22: #{tpu_custom_call.1} parent=1 // pred_check
      _
    $region23: #{tpu_custom_call.1} parent=1 // pred_check_branch
      %98 = sbr.rel (0) target = $region25
    $region24: #{tpu_custom_call.1} parent=1 // pred_region
      %100 = dma.done [#allocation4], 128
    $region25: #{tpu_custom_call.1} parent=1 // pred_fallthru
      _
    %101 = vsyncpa [#allocation3], 1
    %102 = vsyncpa [#allocation6], 1
    %103 = vsyncpa [#allocation4], 1

</llo_original>
